<compile_context>
chip_gen: v7x
topology: tpu7x:2x2x1
jax: 0.10.0
libtpu: 0.0.40
codegen_flags: <defaults>
</compile_context>

<pallas_src>
import jax
import jax.numpy as jnp
from jax.experimental import pallas as pl
from jax.experimental.pallas import tpu as pltpu


def conv_bn_relu_kernel(p_ref, w_ref, shift_ref, o_ref):
    # p_ref:     (C_in*K, TL)   bf16 im2col patches (lane axis = flattened N*L)
    # w_ref:     (TC, C_in*K)   bf16 conv weights with BN scale folded in
    # shift_ref: (TC, 1)        f32 folded BN shift (includes conv bias)
    # o_ref:     (TC, TL)
    acc = jnp.dot(w_ref[...], p_ref[...], preferred_element_type=jnp.float32)
    y = jnp.maximum(acc + shift_ref[...], 0.0)          # BN shift + ReLU
    o_ref[...] = y.astype(o_ref.dtype)


def _round_up(a, b):
    return (a + b - 1) // b * b


def conv1d_bn_relu_dropout(x, w, b, gamma, beta, run_mean, run_var, eps=1e-5):
    """x: (N, C_in, L)  w: (C_out, C_in, K)  -> (N, C_out, L)  (eval-mode BN).

    # TODO(synk): BatchNorm1d is applied with *eval* (running-stat) semantics;
    # train-mode batch statistics are not reproduced.
    """
    N, C_in, L = x.shape
    C_out, _, K = w.shape
    pad = K // 2
    CK = C_in * K

    # --- Fold BatchNorm (eval mode) into the conv weights / bias (plain JAX) ---
    scale = gamma / jnp.sqrt(run_var + eps)                         # (C_out,)
    shift = (b - run_mean) * scale + beta                           # (C_out,)
    w_mat = (w * scale[:, None, None]).reshape(C_out, CK)           # (C_out, C_in*K)
    w_mat = w_mat.astype(jnp.bfloat16)
    shift2 = shift.reshape(C_out, 1).astype(jnp.float32)

    # --- im2col: (C_in*K, N*L) patch matrix, lane axis = flattened (N, L) ---
    xp = jnp.pad(x, ((0, 0), (0, 0), (pad, pad))).astype(jnp.bfloat16)
    patches = jnp.stack([xp[:, :, k:k + L] for k in range(K)], axis=2)  # (N,C_in,K,L)
    patches = patches.transpose(1, 2, 0, 3).reshape(CK, N * L)          # (C_in*K, N*L)

    # --- tiling of the channel (sublane) axis ---
    if C_out <= 256:
        TC, C_out_pad = C_out, C_out   # single block, full extent
    else:
        TC = 256                       # multiple of 8 (sublane aligned)
        C_out_pad = _round_up(C_out, TC)
    if C_out_pad != C_out:
        w_mat = jnp.pad(w_mat, ((0, C_out_pad - C_out), (0, 0)))
        shift2 = jnp.pad(shift2, ((0, C_out_pad - C_out), (0, 0)))

    # --- tiling of the flattened (N*L) lane axis ---
    NL = N * L
    if NL <= 2048:
        TL, NL_pad = NL, NL            # single block, full extent
    else:
        TL = 2048                      # lane-dense tiles, multiple of 128
        NL_pad = _round_up(NL, TL)
    if NL_pad != NL:
        patches = jnp.pad(patches, ((0, 0), (0, NL_pad - NL)))

    out_slab = pl.pallas_call(
        conv_bn_relu_kernel,
        out_shape=jax.ShapeDtypeStruct((C_out_pad, NL_pad), x.dtype),
        grid_spec=pltpu.PrefetchScalarGridSpec(
            num_scalar_prefetch=0,
            grid=(C_out_pad // TC, NL_pad // TL),
            in_specs=[
                pl.BlockSpec((CK, TL), lambda c, i: (0, i)),
                pl.BlockSpec((TC, CK), lambda c, i: (c, 0)),
                pl.BlockSpec((TC, 1), lambda c, i: (c, 0)),
            ],
            out_specs=pl.BlockSpec((TC, TL), lambda c, i: (c, i)),
        ),
        compiler_params=pltpu.CompilerParams(
            dimension_semantics=("parallel", "parallel")),
    )(patches, w_mat, shift2)

    # Layout plumbing back to PyTorch's (N, C_out, L).
    out = out_slab[:C_out, :NL].reshape(C_out, N, L).transpose(1, 0, 2)
    # TODO(synk): nn.Dropout(p=0.5) in *training* mode (random mask + 1/(1-p)
    # scaling) is not reproduced; inference semantics (identity) used.
    return out


if __name__ == "__main__":
    # Small shapes consistent with the module: input_dim=4, hidden_dims=8,
    # kernel_size=5, batch=2, sequence length=16.
    N, C_in, C_out, L, K = 2, 4, 8, 16, 5

    key = jax.random.PRNGKey(0)
    k1, k2, k3, k4, k5, k6, k7 = jax.random.split(key, 7)

    x = jax.random.normal(k1, (N, C_in, L), jnp.float32)

    # Deterministic parameter init (PyTorch Conv1d default: U(-s, s), s=1/sqrt(C_in*K))
    s = 1.0 / (C_in * K) ** 0.5
    w = jax.random.uniform(k2, (C_out, C_in, K), jnp.float32, -s, s)
    b = jax.random.uniform(k3, (C_out,), jnp.float32, -s, s)
    gamma = jax.random.uniform(k4, (C_out,), jnp.float32, 0.5, 1.5)
    beta = 0.1 * jax.random.normal(k5, (C_out,), jnp.float32)
    run_mean = 0.1 * jax.random.normal(k6, (C_out,), jnp.float32)
    run_var = jax.random.uniform(k7, (C_out,), jnp.float32, 0.5, 1.5)

    out = conv1d_bn_relu_dropout(x, w, b, gamma, beta, run_mean, run_var)
    out = jax.block_until_ready(out)
    assert out.shape == (N, C_out, L)

    # --- Check 1 (tight): same bf16-rounded folded operands, pure-JAX f32 math.
    # Verifies the kernel wiring (im2col, matmul, shift, ReLU) is exact modulo
    # f32 accumulation order.
    scale = gamma / jnp.sqrt(run_var + 1e-5)
    shift = (b - run_mean) * scale + beta
    w_q = (w * scale[:, None, None]).reshape(C_out, C_in * K)
    w_q = w_q.astype(jnp.bfloat16).astype(jnp.float32)
    xp_q = jnp.pad(x, ((0, 0), (0, 0), (K // 2, K // 2)))
    xp_q = xp_q.astype(jnp.bfloat16).astype(jnp.float32)
    p_q = jnp.stack([xp_q[:, :, k:k + L] for k in range(K)], axis=2)
    p_q = p_q.transpose(1, 2, 0, 3).reshape(C_in * K, N * L)
    ref_tight = jnp.maximum(
        jnp.dot(w_q, p_q, precision=jax.lax.Precision.HIGHEST) + shift[:, None], 0.0)
    ref_tight = ref_tight.reshape(C_out, N, L).transpose(1, 0, 2)
    assert jnp.allclose(out, ref_tight, atol=1e-3, rtol=1e-3), "kernel math mismatch"

    # --- Check 2 (semantic): full-precision Conv1d + BatchNorm1d(eval) + ReLU.
    # Loose tolerance only accounts for the bf16 cast of the matmul operands.
    ref = jax.lax.conv_general_dilated(
        x, w, window_strides=(1,), padding=((K // 2, K // 2),),
        dimension_numbers=("NCH", "OIH", "NCH"))
    ref = ref + b[None, :, None]
    ref = (ref - run_mean[None, :, None]) / jnp.sqrt(run_var[None, :, None] + 1e-5)
    ref = ref * gamma[None, :, None] + beta[None, :, None]
    ref = jnp.maximum(ref, 0.0)
    assert jnp.allclose(out, ref, atol=5e-2, rtol=5e-2), "semantic mismatch"

    print("KERNEL_OK")
</pallas_src>

<mosaic_0001>
module attributes {stable_mosaic.version = 11 : i64} {
  func.func @conv_bn_relu_kernel(%arg0: i32, %arg1: i32, %arg2: memref<20x32xbf16, #tpu.memory_space<vmem>>, %arg3: memref<8x20xbf16, #tpu.memory_space<vmem>>, %arg4: memref<8x1xf32, #tpu.memory_space<vmem>>, %arg5: memref<8x32xf32, #tpu.memory_space<vmem>>) attributes {dimension_semantics = [#tpu.dimension_semantics<parallel>, #tpu.dimension_semantics<parallel>], iteration_bounds = array<i64: 1, 1>, scalar_prefetch = 0 : i64, scratch_operands = 0 : i64, tpu.core_type = #tpu.core_type<tc>, window_params = [{transform_indices = @transform_0, window_bounds = array<i64: 20, 32>}, {transform_indices = @transform_1, window_bounds = array<i64: 8, 20>}, {transform_indices = @transform_2, window_bounds = array<i64: 8, 1>}, {transform_indices = @transform_3, window_bounds = array<i64: 8, 32>}]} {
    %c0 = arith.constant 0 : index
    %c0_0 = arith.constant 0 : index
    %0 = vector.load %arg3[%c0, %c0_0] : memref<8x20xbf16, #tpu.memory_space<vmem>>, vector<8x20xbf16>
    %c0_1 = arith.constant 0 : index
    %c0_2 = arith.constant 0 : index
    %1 = vector.load %arg2[%c0_1, %c0_2] : memref<20x32xbf16, #tpu.memory_space<vmem>>, vector<20x32xbf16>
    %cst = arith.constant dense<0.000000e+00> : vector<8x32xf32>
    %2 = tpu.matmul %0, %1, %cst {dimension_numbers = #tpu.dot_dimension_numbers<[1], [0], [0], [1], [0, 0, 1, 1], [], []>} : vector<8x20xbf16>, vector<20x32xbf16>, vector<8x32xf32> -> vector<8x32xf32>
    %c0_3 = arith.constant 0 : index
    %c0_4 = arith.constant 0 : index
    %3 = vector.load %arg4[%c0_3, %c0_4] : memref<8x1xf32, #tpu.memory_space<vmem>>, vector<8x1xf32>
    %4 = vector.broadcast %3 : vector<8x1xf32> to vector<8x32xf32>
    %5 = arith.addf %2, %4 : vector<8x32xf32>
    %cst_5 = arith.constant 0.000000e+00 : f32
    %6 = vector.broadcast %cst_5 : f32 to vector<8x32xf32>
    %7 = arith.maximumf %5, %6 : vector<8x32xf32>
    %c0_6 = arith.constant 0 : index
    %c0_7 = arith.constant 0 : index
    %8 = vector.load %arg5[%c0_6, %c0_7] : memref<8x32xf32, #tpu.memory_space<vmem>>, vector<8x32xf32>
    tpu.vector_store %arg5[%c0_6, %c0_7], %7 {strides = array<i32>} : memref<8x32xf32, #tpu.memory_space<vmem>>, vector<8x32xf32>,
    return
  }
  func.func @transform_0(%arg0: i32, %arg1: i32) -> (i32, i32) {
    %c0_i32 = arith.constant 0 : i32
    %c0_i32_0 = arith.constant 0 : i32
    return %c0_i32, %arg1 : i32, i32
  }
  func.func @transform_1(%arg0: i32, %arg1: i32) -> (i32, i32) {
    %c0_i32 = arith.constant 0 : i32
    %c0_i32_0 = arith.constant 0 : i32
    return %arg0, %c0_i32 : i32, i32
  }
  func.func @transform_2(%arg0: i32, %arg1: i32) -> (i32, i32) {
    %c0_i32 = arith.constant 0 : i32
    %c0_i32_0 = arith.constant 0 : i32
    return %arg0, %c0_i32 : i32, i32
  }
  func.func @transform_3(%arg0: i32, %arg1: i32) -> (i32, i32) {
    %c0_i32 = arith.constant 0 : i32
    return %arg0, %arg1 : i32, i32
  }
}

</mosaic_0001>

<llo_original>
// kernel: tpu_custom_call.1
$region0: #{tpu_custom_call.1}
  #allocation0 [shape = 'u32[]', space=smem, size = 0x4, offset = 0x4, fixed_abs, tag = 'smem constant byte address 0x4 - core index']
  #allocation1 [shape = 'u32[144,128]{1,0:T(1,128)}', space=vmem, size = 0x12000, scoped, tag = 'internal scratch']
  %s0 = inlined_call_operand.hbm [shape: bf16[20,32], index: 0, kind: input, shape index: {}]
  %s1 = inlined_call_operand.vmem [shape: bf16[8,20], index: 1, kind: input, shape index: {}]
  %s2 = inlined_call_operand.vmem [shape: f32[8,1], index: 2, kind: input, shape index: {}]
  %s3 = inlined_call_operand.hbm [shape: f32[8,32], index: 3, kind: output, shape index: {}]
  %s4 = sld [smem:[#allocation0]]
  $region26: #{tpu_custom_call.1} parent=0
    _
  %s6 = ssub.s32 1, %s4
  %s7 = scalar_select 0, %s6, %s4
  $region1: #{tpu_custom_call.1} parent=0
    #allocation2 [shape = 'u8[6144]{0}', space=vmem, size = 0x1800, scoped, tag = 'input window, operand 0, single buffered']
    #allocation3 [shape = 's32[1]{0}', space=sflag, size = 0x4, scoped, tag = 'scoped memory for tpu_custom_call.1']
    #allocation4 [shape = 's32[1]{0}', space=sflag, size = 0x4, scoped, tag = 'scoped memory for tpu_custom_call.1']
    #allocation5 [shape = 'u8[4096]{0}', space=vmem, size = 0x1000, scoped, tag = 'output window, operand 0, single buffered']
    %8 = vsyncpa [#allocation3], 0
    %9 = vsyncpa [#allocation4], 0
    // Predicated region
    $region2: #{tpu_custom_call.1} parent=1 // pred_check
      _
    $region3: #{tpu_custom_call.1} parent=1 // pred_check_branch
      %11 = sbr.rel (0) target = $region5
    $region4: #{tpu_custom_call.1} parent=1 // pred_region
      %s13 = ssub.s32 192, 192
      %14 = vsyncadd [#allocation3], %s13
      %s15 = sshll.u32 [#allocation2], 4
      %s16 = int_to_ptr.vmem [resolvable:$true] %s15
      %21 = dma.hbm_to_vmem [thread:$0]  %s0, 192, %s16, [#allocation3], 64, 64, 4
    $region5: #{tpu_custom_call.1} parent=1 // pred_fallthru
      _
    // Predicated region
    $region6: #{tpu_custom_call.1} parent=1 // pred_check
      _
    $region7: #{tpu_custom_call.1} parent=1 // pred_check_branch
      %23 = sbr.rel (0) target = $region9
    $region8: #{tpu_custom_call.1} parent=1 // pred_region
      _
    $region9: #{tpu_custom_call.1} parent=1 // pred_fallthru
      _
    // Predicated region
    $region10: #{tpu_custom_call.1} parent=1 // pred_check
      _
    $region11: #{tpu_custom_call.1} parent=1 // pred_check_branch
      %25 = sbr.rel (0) target = $region13
    $region12: #{tpu_custom_call.1} parent=1 // pred_region
      _
    $region13: #{tpu_custom_call.1} parent=1 // pred_fallthru
      _
    // Predicated region
    $region14: #{tpu_custom_call.1} parent=1 // pred_check
      _
    $region15: #{tpu_custom_call.1} parent=1 // pred_check_branch
      %27 = sbr.rel (0) target = $region17
    $region16: #{tpu_custom_call.1} parent=1 // pred_region
      %28 = dma.done [#allocation3], 192
    $region17: #{tpu_custom_call.1} parent=1 // pred_fallthru
      _
    %v30 = vld [vmem:[%s1] sm:$0xf]
    %v31 = vld [vmem:[#allocation2] sm:$0xf]
    %v32 = vld [vmem:[#allocation2 + $0x4] sm:$0xf]
    %v33 = vld [vmem:[#allocation2 + $0x8] sm:$0x3]
    %v34 = vld [vmem:[%s2] sm:$0xff]
    %36 = vset.pattern.permute.xlu0 0
    %37 = vperm.xlu0 %36, %v34
    %v38 = vpop.permute.xlu0 %37
    %v43 = vunpack.c.l.b16 %v31
    %v44 = vunpack.c.l.b16 %v32
    %v45 = vunpack.c.l.b16 %v33
    %v46 = vpack.c.b16 %v44, %v43
    %v47 = vpack.c.b16 %v45, %v45
    %vm49 = vcmask 162816
    %v51 = vsel %vm49, %v30, 0
    %vm53 = vcmask 1041408
    %v55 = vsel %vm53, %v47, 0
    %57 = vmatprep.subr.bf16.mxu0 0
    %58 = vmatpush1.bf16.msra.mxu0 %v46
    %59 = vmatprep.subr.bf16.mxu0 0
    %60 = vmatpush1.bf16.msra.mxu0 %v55
    %61 = vmatprep.subr.bf16.mxu0 0
    %62 = vmatpush1.bf16.msra.mxu0 0
    %63 = vmatprep.subr.bf16.mxu0 0
    %64 = vmatpush1.bf16.msra.mxu0 0
    %65 = vmatprep.subr.bf16.mxu0 0
    %66 = vmatpush1.bf16.msra.mxu0 0
    %67 = vmatprep.subr.bf16.mxu0 0
    %68 = vmatpush1.bf16.msra.mxu0 0
    %69 = vmatprep.subr.bf16.mxu0 0
    %70 = vmatpush1.bf16.msra.mxu0 0
    %71 = vmatprep.subr.bf16.mxu0 0
    %72 = vmatpush1.bf16.msra.mxu0 0
    %73 = vmatprep.subr.bf16.mxu0 0
    %74 = vmatpush1.bf16.msra.mxu0 0
    %75 = vmatprep.subr.bf16.mxu0 0
    %76 = vmatpush1.bf16.msra.mxu0 0
    %77 = vmatprep.subr.bf16.mxu0 0
    %78 = vmatpush1.bf16.msra.mxu0 0
    %79 = vmatprep.subr.bf16.mxu0 0
    %80 = vmatpush1.bf16.msra.mxu0 0
    %81 = vmatprep.subr.bf16.mxu0 0
    %82 = vmatpush1.bf16.msra.mxu0 0
    %83 = vmatprep.subr.bf16.mxu0 0
    %84 = vmatpush1.bf16.msra.mxu0 0
    %85 = vmatprep.subr.bf16.mxu0 0
    %86 = vmatpush1.bf16.msra.mxu0 0
    %87 = vmatprep.subr.bf16.mxu0 0
    %88 = vmatpush1.bf16.msra.mxu0 0
    %89 = vmatprep.mubr.bf16.mxu0 0
    %90 = vmatmul.mubr.bf16.gmra.mrb[0].mxu0 %v51
    %v91 = vpop.f32.mrb[0].mxu0
    %v92 = vadd.f32 %v38, %v91
    %v93 = vpop.f32.mrb[0].mxu0
    %v94 = vpop.f32.mrb[0].mxu0
    %v95 = vpop.f32.mrb[0].mxu0
    %96 = vdwg.mxu0
    %v97 = vmax.f32 %v92, 0.0
    %vm98 = vcmask 261120
    %99 = vst.msk [vmem:[#allocation5] sm:$0xff] %vm98, %v97
    // Predicated region
    $region18: #{tpu_custom_call.1} parent=1 // pred_check
      _
    $region19: #{tpu_custom_call.1} parent=1 // pred_check_branch
      %101 = sbr.rel (0) target = $region21
    $region20: #{tpu_custom_call.1} parent=1 // pred_region
      %s103 = ssub.s32 128, 128
      %104 = vsyncadd [#allocation4], %s103
      %s106 = sshll.u32 [#allocation5], 4
      %s107 = int_to_ptr.vmem [resolvable:$true] %s106
      %109 = dma.vmem_to_hbm [thread:$0]  %s107, 128, %s3, [#allocation4]
    $region21: #{tpu_custom_call.1} parent=1 // pred_fallthru
      _
    // Predicated region
    $region22: #{tpu_custom_call.1} parent=1 // pred_check
      _
    $region23: #{tpu_custom_call.1} parent=1 // pred_check_branch
      %111 = sbr.rel (0) target = $region25
    $region24: #{tpu_custom_call.1} parent=1 // pred_region
      %112 = dma.done [#allocation4], 128
    $region25: #{tpu_custom_call.1} parent=1 // pred_fallthru
      _
    %113 = vsyncpa [#allocation3], 1
    %114 = vsyncpa [#allocation4], 1

</llo_original>
